<compile_context>
chip_gen: v6e
topology: v6e:2x2x1
jax: 0.10.0
libtpu: 0.0.40
codegen_flags: <defaults>
</compile_context>

<pallas_src>
import functools

import jax
import jax.numpy as jnp
from jax import lax
from jax.experimental import pallas as pl
from jax.experimental.pallas import tpu as pltpu

_SUBLANE = 8
_LANE = 128
_TARGET_TILE_BYTES = 2 * 1024 * 1024  # ~2 MiB per input tile


def _mymse_kernel(y_ref, label_ref, out_ref, *, n_valid, tile_n):
    """One batch tile: row-wise softmax, squared error, partial sum."""
    i = pl.program_id(0)

    y = y_ref[...].astype(jnp.float32)        # [tile_n, C]
    lab = label_ref[...].astype(jnp.float32)  # [tile_n, C]

    # Numerically-stable softmax over the class (lane) axis.
    m = jnp.max(y, axis=-1, keepdims=True)                # XLU reduce
    e = jnp.exp(y - m)                                     # EUP
    denom = jnp.sum(e, axis=-1, keepdims=True)
    p = e * pl.reciprocal(denom, approx=True)              # EUP vrcp (free slot)

    d = p - lab
    sq = d * d

    # Mask out zero-padded rows (only present when N % tile_n != 0).
    if n_valid % tile_n != 0:
        row = lax.broadcasted_iota(jnp.int32, (tile_n, 1), 0) + i * tile_n
        sq = jnp.where(row < n_valid, sq, 0.0)

    partial = jnp.sum(sq)  # scalar partial sum for this tile
    # Lane-dense (1, 8, 128) output tile; wrapper reads [:, 0, 0].
    out_ref[...] = jnp.broadcast_to(partial, out_ref.shape).astype(jnp.float32)


def _pick_tile_n(n, c, itemsize):
    """Rows per tile: ~2 MiB per input tile, multiple of 8, capped at N."""
    rows = _TARGET_TILE_BYTES // max(1, c * itemsize)
    rows = max(_SUBLANE, (rows // _SUBLANE) * _SUBLANE)
    n_rounded = max(_SUBLANE, ((n + _SUBLANE - 1) // _SUBLANE) * _SUBLANE)
    return int(min(rows, n_rounded))


def mymse_loss(y, label):
    """Pallas-backed equivalent of MyMSE.forward(y, label). Returns a scalar."""
    assert y.shape == label.shape and y.ndim == 2
    n, c = y.shape
    itemsize = jnp.dtype(y.dtype).itemsize

    tile_n = _pick_tile_n(n, c, itemsize)
    n_pad = ((n + tile_n - 1) // tile_n) * tile_n
    nb = n_pad // tile_n

    if n_pad != n:
        pad = ((0, n_pad - n), (0, 0))
        y = jnp.pad(y, pad)
        label = jnp.pad(label, pad)

    kernel = functools.partial(_mymse_kernel, n_valid=n, tile_n=tile_n)

    cost = pl.CostEstimate(
        flops=7 * n * c,
        transcendentals=n * c,
        bytes_accessed=2 * n_pad * c * itemsize + nb * _SUBLANE * _LANE * 4,
    )

    partials = pl.pallas_call(
        kernel,
        out_shape=jax.ShapeDtypeStruct((nb, _SUBLANE, _LANE), jnp.float32),
        grid=(nb,),
        in_specs=[
            pl.BlockSpec((tile_n, c), lambda i: (i, 0)),
            pl.BlockSpec((tile_n, c), lambda i: (i, 0)),
        ],
        out_specs=pl.BlockSpec((1, _SUBLANE, _LANE), lambda i: (i, 0, 0)),
        compiler_params=pltpu.CompilerParams(
            dimension_semantics=("parallel",),
        ),
        cost_estimate=cost,
    )(y, label)

    # Tiny final reduction + normalization (one value per grid block).
    return jnp.sum(partials[:, 0, 0]) / jnp.float32(n * c)


def _reference(y, label):
    p = jax.nn.softmax(y.astype(jnp.float32), axis=1)
    return jnp.sum((p - label.astype(jnp.float32)) ** 2) / (y.shape[0] * y.shape[1])


if __name__ == "__main__":
    key = jax.random.PRNGKey(0)
    k1, k2, k3, k4 = jax.random.split(key, 4)

    # Primary small test (batch divides the tile exactly).
    N, C = 8, 128
    y = jax.random.normal(k1, (N, C), dtype=jnp.float32)
    label = jax.nn.softmax(jax.random.normal(k2, (N, C), dtype=jnp.float32), axis=1)
    loss = mymse_loss(y, label)
    jax.block_until_ready(loss)
    ref = _reference(y, label)
    assert jnp.allclose(loss, ref, atol=1e-5, rtol=5e-3), (loss, ref)

    # Ragged batch: exercises the zero-pad + in-kernel row-mask path.
    N2, C2 = 20, 128
    y2 = jax.random.normal(k3, (N2, C2), dtype=jnp.float32)
    label2 = jax.nn.softmax(jax.random.normal(k4, (N2, C2), dtype=jnp.float32), axis=1)
    loss2 = mymse_loss(y2, label2)
    jax.block_until_ready(loss2)
    ref2 = _reference(y2, label2)
    assert jnp.allclose(loss2, ref2, atol=1e-5, rtol=5e-3), (loss2, ref2)

    print("KERNEL_OK")
</pallas_src>

<mosaic_0001>
module attributes {stable_mosaic.version = 11 : i64} {
  func.func @_mymse_kernel(%arg0: i32, %arg1: memref<8x128xf32, #tpu.memory_space<vmem>>, %arg2: memref<8x128xf32, #tpu.memory_space<vmem>>, %arg3: memref<1x8x128xf32, #tpu.memory_space<vmem>>) attributes {dimension_semantics = [#tpu.dimension_semantics<parallel>], iteration_bounds = array<i64: 1>, scalar_prefetch = 0 : i64, scratch_operands = 0 : i64, tpu.core_type = #tpu.core_type<tc>, window_params = [{transform_indices = @transform_0, window_bounds = array<i64: 8, 128>}, {transform_indices = @transform_1, window_bounds = array<i64: 8, 128>}, {transform_indices = @transform_2, window_bounds = array<i64: 1, 8, 128>}]} {
    %c0 = arith.constant 0 : index
    %c0_0 = arith.constant 0 : index
    %0 = vector.load %arg1[%c0, %c0_0] : memref<8x128xf32, #tpu.memory_space<vmem>>, vector<8x128xf32>
    %c0_1 = arith.constant 0 : index
    %c0_2 = arith.constant 0 : index
    %1 = vector.load %arg2[%c0_1, %c0_2] : memref<8x128xf32, #tpu.memory_space<vmem>>, vector<8x128xf32>
    %cst = arith.constant dense<0xFF800000> : vector<8xf32>
    %2 = vector.multi_reduction <maximumf>, %0, %cst [1] : vector<8x128xf32> to vector<8xf32>
    %3 = vector.shape_cast %2 : vector<8xf32> to vector<8x1xf32>
    %4 = vector.broadcast %3 : vector<8x1xf32> to vector<8x128xf32>
    %5 = arith.subf %0, %4 : vector<8x128xf32>
    %6 = math.exp %5 : vector<8x128xf32>
    %cst_3 = arith.constant dense<0.000000e+00> : vector<8xf32>
    %7 = vector.multi_reduction <add>, %6, %cst_3 [1] : vector<8x128xf32> to vector<8xf32>
    %8 = vector.shape_cast %7 : vector<8xf32> to vector<8x1xf32>
    %9 = tpu.reciprocal %8 {approx = true} : vector<8x1xf32> -> vector<8x1xf32>
    %10 = vector.broadcast %9 : vector<8x1xf32> to vector<8x128xf32>
    %11 = arith.mulf %6, %10 : vector<8x128xf32>
    %12 = arith.subf %11, %1 : vector<8x128xf32>
    %13 = arith.mulf %12, %12 : vector<8x128xf32>
    %14 = vector.shape_cast %13 : vector<8x128xf32> to vector<1x8x128xf32>
    %cst_4 = arith.constant dense<0.000000e+00> : vector<1xf32>
    %15 = vector.multi_reduction <add>, %14, %cst_4 [1, 2] : vector<1x8x128xf32> to vector<1xf32>
    %16 = vector.shape_cast %15 : vector<1xf32> to vector<1x1x1xf32>
    %17 = vector.extract %16[0, 0, 0] : f32 from vector<1x1x1xf32>
    %18 = vector.broadcast %17 : f32 to vector<1x8x128xf32>
    %c0_5 = arith.constant 0 : index
    %c0_6 = arith.constant 0 : index
    %c0_7 = arith.constant 0 : index
    %19 = vector.load %arg3[%c0_5, %c0_6, %c0_7] : memref<1x8x128xf32, #tpu.memory_space<vmem>>, vector<1x8x128xf32>
    tpu.vector_store %arg3[%c0_5, %c0_6, %c0_7], %18 {strides = array<i32>} : memref<1x8x128xf32, #tpu.memory_space<vmem>>, vector<1x8x128xf32>,
    return
  }
  func.func @transform_0(%arg0: i32) -> (i32, i32) {
    %c0_i32 = arith.constant 0 : i32
    %c0_i32_0 = arith.constant 0 : i32
    return %arg0, %c0_i32 : i32, i32
  }
  func.func @transform_1(%arg0: i32) -> (i32, i32) {
    %c0_i32 = arith.constant 0 : i32
    %c0_i32_0 = arith.constant 0 : i32
    return %arg0, %c0_i32 : i32, i32
  }
  func.func @transform_2(%arg0: i32) -> (i32, i32, i32) {
    %c0_i32 = arith.constant 0 : i32
    %c0_i32_0 = arith.constant 0 : i32
    %c0_i32_1 = arith.constant 0 : i32
    return %arg0, %c0_i32, %c0_i32_0 : i32, i32, i32
  }
}

</mosaic_0001>

<llo_original>
// kernel: tpu_custom_call.1
$region0: #{tpu_custom_call.1}
  #allocation0 [shape = 'u32[]', space=smem, size = 0x4, offset = 0x4, fixed_abs, tag = 'smem constant byte address 0x4 - core index']
  #allocation1 [shape = 'u32[144,128]{1,0:T(1,128)}', space=vmem, size = 0x12000, scoped, tag = 'internal scratch']
  %s0 = inlined_call_operand.hbm [shape: f32[8,128], index: 0, kind: input, shape index: {}]
  %s1 = inlined_call_operand.hbm [shape: f32[8,128], index: 1, kind: input, shape index: {}]
  %s2 = inlined_call_operand.hbm [shape: f32[1,8,128], index: 2, kind: output, shape index: {}]
  %s3 = sld [smem:[#allocation0]]
  $region26: #{tpu_custom_call.1} parent=0
    _
  %s5 = ssub.s32 1, %s3
  %s6 = scalar_select 0, %s5, %s3
  $region1: #{tpu_custom_call.1} parent=0
    #allocation2 [shape = 'u8[4096]{0}', space=vmem, size = 0x1000, scoped, tag = 'input window, operand 0, single buffered']
    #allocation3 [shape = 's32[1]{0}', space=sflag, size = 0x4, scoped, tag = 'scoped memory for tpu_custom_call.1']
    #allocation4 [shape = 's32[1]{0}', space=sflag, size = 0x4, scoped, tag = 'scoped memory for tpu_custom_call.1']
    #allocation5 [shape = 'u8[4096]{0}', space=vmem, size = 0x1000, scoped, tag = 'input window, operand 1, single buffered']
    #allocation6 [shape = 's32[1]{0}', space=sflag, size = 0x4, scoped, tag = 'scoped memory for tpu_custom_call.1']
    #allocation7 [shape = 'u8[4096]{0}', space=vmem, size = 0x1000, scoped, tag = 'output window, operand 0, single buffered']
    %7 = vsyncpa [#allocation3], 0
    %8 = vsyncpa [#allocation6], 0
    %9 = vsyncpa [#allocation4], 0
    // Predicated region
    $region2: #{tpu_custom_call.1} parent=1 // pred_check
      _
    $region3: #{tpu_custom_call.1} parent=1 // pred_check_branch
      %11 = sbr.rel (0) target = $region5
    $region4: #{tpu_custom_call.1} parent=1 // pred_region
      %s13 = ssub.s32 128, 128
      %14 = vsyncadd [#allocation3], %s13
      %s16 = sshll.u32 [#allocation2], 4
      %s17 = int_to_ptr.vmem [resolvable:$true] %s16
      %19 = dma.hbm_to_vmem [thread:$0]  %s0, 128, %s17, [#allocation3]
    $region5: #{tpu_custom_call.1} parent=1 // pred_fallthru
      _
    // Predicated region
    $region6: #{tpu_custom_call.1} parent=1 // pred_check
      _
    $region7: #{tpu_custom_call.1} parent=1 // pred_check_branch
      %21 = sbr.rel (0) target = $region9
    $region8: #{tpu_custom_call.1} parent=1 // pred_region
      %s23 = ssub.s32 128, 128
      %24 = vsyncadd [#allocation6], %s23
      %s26 = sshll.u32 [#allocation5], 4
      %s27 = int_to_ptr.vmem [resolvable:$true] %s26
      %29 = dma.hbm_to_vmem [thread:$0]  %s1, 128, %s27, [#allocation6]
    $region9: #{tpu_custom_call.1} parent=1 // pred_fallthru
      _
    // Predicated region
    $region10: #{tpu_custom_call.1} parent=1 // pred_check
      _
    $region11: #{tpu_custom_call.1} parent=1 // pred_check_branch
      %31 = sbr.rel (0) target = $region13
    $region12: #{tpu_custom_call.1} parent=1 // pred_region
      %32 = dma.done [#allocation3], 128
    $region13: #{tpu_custom_call.1} parent=1 // pred_fallthru
      _
    // Predicated region
    $region14: #{tpu_custom_call.1} parent=1 // pred_check
      _
    $region15: #{tpu_custom_call.1} parent=1 // pred_check_branch
      %34 = sbr.rel (0) target = $region17
    $region16: #{tpu_custom_call.1} parent=1 // pred_region
      %35 = dma.done [#allocation6], 128
    $region17: #{tpu_custom_call.1} parent=1 // pred_fallthru
      _
    %v36 = vld [vmem:[#allocation2] sm:$0xff]
    %v37 = vld [vmem:[#allocation5] sm:$0xff]
    %38 = vmax.xlane.f32.xlu0 %v36
    %v39 = vpop.xlane.xlu0 %38
    %v40 = vsub.f32 %v36, %v39
    %v41 = vmul.f32 %v40, 1.442695
    %v42 = vpow.pop %v41
    %43 = vadd.xlane.f32.xlu0 %v42
    %v44 = vpop.xlane.xlu0 %43
    %v45 = vrcp.pop %v44
    %v46 = vmul.f32 %v42, %v45
    %v47 = vsub.f32 %v46, %v37
    %v48 = vmul.f32 %v47, %v47
    %49 = vadd.xlane.f32.xlu0 %v48
    %v50 = vpop.xlane.xlu0 %49
    %v51 = vrot.slane %v50, 4
    %v52 = vadd.f32 %v50, %v51
    %v53 = vrot.slane %v52, 2
    %v54 = vadd.f32 %v52, %v53
    %v55 = vrot.slane %v54, 1
    %v56 = vadd.f32 %v54, %v55
    %s57 = vtos %v56
    %v58 = vstv %s57
    %59 = vst [vmem:[#allocation7] sm:$0xff] %v58
    // Predicated region
    $region18: #{tpu_custom_call.1} parent=1 // pred_check
      _
    $region19: #{tpu_custom_call.1} parent=1 // pred_check_branch
      %61 = sbr.rel (0) target = $region21
    $region20: #{tpu_custom_call.1} parent=1 // pred_region
      %s63 = ssub.s32 128, 128
      %64 = vsyncadd [#allocation4], %s63
      %s66 = sshll.u32 [#allocation7], 4
      %s67 = int_to_ptr.vmem [resolvable:$true] %s66
      %69 = dma.vmem_to_hbm [thread:$0]  %s67, 128, %s2, [#allocation4]
    $region21: #{tpu_custom_call.1} parent=1 // pred_fallthru
      _
    // Predicated region
    $region22: #{tpu_custom_call.1} parent=1 // pred_check
      _
    $region23: #{tpu_custom_call.1} parent=1 // pred_check_branch
      %71 = sbr.rel (0) target = $region25
    $region24: #{tpu_custom_call.1} parent=1 // pred_region
      %72 = dma.done [#allocation4], 128
    $region25: #{tpu_custom_call.1} parent=1 // pred_fallthru
      _
    %73 = vsyncpa [#allocation3], 1
    %74 = vsyncpa [#allocation6], 1
    %75 = vsyncpa [#allocation4], 1

</llo_original>
